<compile_context>
chip_gen: v5e
topology: v5e:2x2
jax: 0.10.0
libtpu: 0.0.40
codegen_flags: <defaults>
</compile_context>

<pallas_src>
import functools

import jax
import jax.numpy as jnp
from jax.experimental import pallas as pl
from jax.experimental.pallas import tpu as pltpu


def _conv_bn_relu_kernel(x_ref, w_ref, scale_ref, bias_ref, o_ref,
                         xpad_ref, patch_ref, *, W, cin, cin_pad, pad_lanes):
    # x_ref:     (1, Cin, M)           f32, one image, M = H*W flattened (spatial on lanes)
    # w_ref:     (Cout, 9*Cin_pad)     bf16, columns ordered (ky, kx, ci) w/ zero-padded ci
    # scale_ref: (Cout, 1)             f32, folded BN scale
    # bias_ref:  (Cout, 1)             f32, folded conv-bias + BN bias
    # o_ref:     (1, Cout, M)          f32, lane-dense output
    # xpad_ref:  (Cin_pad, M + 2*pad)  f32 VMEM staging buffer (zero lane halo + pad rows)
    # patch_ref: (9*Cin_pad, M)        f32 VMEM im2col matrix (tile-aligned per-tap blocks)
    M = x_ref.shape[-1]

    # Zero the staging buffer (halo + channel-pad rows).  It is only a few vregs, and
    # zeroing every step keeps the kernel correct under megacore grid partitioning
    # (each core has its own scratch and may never execute program_id == 0).
    xpad_ref[...] = jnp.zeros_like(xpad_ref)
    xpad_ref[pl.ds(0, cin), pl.ds(pad_lanes, M)] = x_ref[0]

    # Lane-only (1, M) column-edge masks, hoisted out of the tap loop.  Top/bottom taps
    # need no mask: they read the zeroed halo.  (W is a power of two here, so % is a
    # cheap mask op; for general W precompute these masks host-side.)
    col = jax.lax.broadcasted_iota(jnp.int32, (1, M), 1) % W
    not_left = col >= 1           # applied when dx == -1
    not_right = col <= W - 2      # applied when dx == +1

    # Build the (9*Cin_pad, M) im2col matrix: one lane-shifted, column-masked copy of the
    # padded channel block per 3x3 tap.  Static lane-offset reads (XLU rotates) +
    # full-sublane-tile stores.
    for ky in range(3):
        for kx in range(3):
            dy, dx = ky - 1, kx - 1
            shift = dy * W + dx                               # static lane offset
            piece = xpad_ref[:, pl.ds(pad_lanes + shift, M)]  # (Cin_pad, M) f32
            if dx == -1:
                piece = jnp.where(not_left, piece, 0.0)
            elif dx == 1:
                piece = jnp.where(not_right, piece, 0.0)
            tap = ky * 3 + kx
            patch_ref[pl.ds(tap * cin_pad, cin_pad), :] = piece

    # One MXU matmul, K = 9*Cin_pad, bf16 inputs, f32 accumulation.
    # TODO(synk): on v7x the MRB accumulates in place, so 9 per-tap accumulating dots
    # (no patch buffer) would also be fine there; kept a single code path here.
    acc = jnp.dot(w_ref[...], patch_ref[...].astype(jnp.bfloat16),
                  preferred_element_type=jnp.float32)         # (Cout, M) f32

    # Fused BN scale/bias + ReLU in f32; (Cout, 1) broadcasts along the lanes.
    y = acc * scale_ref[...] + bias_ref[...]
    o_ref[0] = jnp.maximum(y, 0.0).astype(o_ref.dtype)


def conv_bn_relu(x_flat, w_mat, scale, bias, *, H, W):
    """x_flat: (N, Cin, H*W) f32; w_mat: (Cout, 9*Cin_pad) bf16; scale/bias: (Cout,) f32."""
    N, Cin, M = x_flat.shape
    Cout, K = w_mat.shape
    Cin_pad = K // 9

    # Lane halo for the shifted tap reads (needs >= W+1), rounded to a 128-lane boundary.
    pad_lanes = ((W + 1 + 127) // 128) * 128

    kernel = functools.partial(_conv_bn_relu_kernel, W=W,
                               cin=Cin, cin_pad=Cin_pad, pad_lanes=pad_lanes)

    cost = pl.CostEstimate(
        flops=2 * N * Cout * 9 * Cin * M,
        transcendentals=0,
        bytes_accessed=(N * Cin * M * 4) + (Cout * K * 2) + (2 * Cout * 4)
                       + (N * Cout * M * 4),
    )

    return pl.pallas_call(
        kernel,
        out_shape=jax.ShapeDtypeStruct((N, Cout, M), jnp.float32),
        grid_spec=pltpu.PrefetchScalarGridSpec(
            num_scalar_prefetch=0,
            # One image per grid step; "parallel" lets v7x shard steps across its two
            # TensorCores.  Working set per step is ~100 KB, far under every generation's
            # scoped-VMEM default.
            # NOTE: if N/H/W/Cin scale up, tile rows of H (2-row halo) and size the tile
            # around patch_ref (~9*Cin_pad*tileM*4B) against v7x's 64 MiB physical VMEM;
            # set vmem_limit_bytes explicitly there.
            grid=(N,),
            in_specs=[
                pl.BlockSpec((1, Cin, M), lambda n: (n, 0, 0)),
                pl.BlockSpec((Cout, K), lambda n: (0, 0)),
                pl.BlockSpec((Cout, 1), lambda n: (0, 0)),
                pl.BlockSpec((Cout, 1), lambda n: (0, 0)),
            ],
            out_specs=pl.BlockSpec((1, Cout, M), lambda n: (n, 0, 0)),
            scratch_shapes=[
                pltpu.VMEM((Cin_pad, M + 2 * pad_lanes), jnp.float32),  # padded input
                pltpu.VMEM((9 * Cin_pad, M), jnp.float32),              # im2col matrix
            ],
        ),
        compiler_params=pltpu.CompilerParams(
            dimension_semantics=("parallel",),
        ),
        cost_estimate=cost,
    )(x_flat, w_mat,
      scale.reshape(Cout, 1).astype(jnp.float32),
      bias.reshape(Cout, 1).astype(jnp.float32))


def conv_module_forward(x_nchw, params):
    """PyTorch-equivalent forward of `conv` (eval-mode BatchNorm). x_nchw: (N, Cin, H, W)."""
    w = params["conv_weight"]          # (Cout, Cin, 3, 3)  PyTorch OIHW layout
    cb = params["conv_bias"]           # (Cout,)
    gamma = params["bn_gamma"]
    beta = params["bn_beta"]
    mean = params["bn_running_mean"]
    var = params["bn_running_var"]
    eps = params["bn_eps"]

    N, Cin, H, W = x_nchw.shape
    Cout = w.shape[0]
    Cin_pad = ((Cin + 7) // 8) * 8     # f32 sublane tile -> tile-aligned per-tap patch stores

    # Fold conv bias + BatchNorm (eval) into a per-channel scale/bias (kept f32).
    scale = (gamma / jnp.sqrt(var + eps)).astype(jnp.float32)
    bias = (beta + (cb - mean) * scale).astype(jnp.float32)

    # Weight matrix (Cout, 9*Cin_pad), columns ordered (ky, kx, ci) with zero-padded
    # channels.  The weight is tiny; this is the only wrapper-side data prep.
    w_t = jnp.transpose(w, (0, 2, 3, 1)).astype(jnp.float32)           # (Cout, 3, 3, Cin)
    w_t = jnp.pad(w_t, ((0, 0), (0, 0), (0, 0), (0, Cin_pad - Cin)))
    w_mat = w_t.reshape(Cout, 9 * Cin_pad).astype(jnp.bfloat16)

    # Free reshapes only -- no transpose / cast passes over the activations in HBM.
    x_flat = x_nchw.astype(jnp.float32).reshape(N, Cin, H * W)
    y_flat = conv_bn_relu(x_flat, w_mat, scale, bias, H=H, W=W)        # (N, Cout, H*W)
    return y_flat.reshape(N, Cout, H, W)


def _reference_forward(x_nchw, params, *, round_inputs_to_bf16=False):
    """Pure-JAX reference (lax conv) for correctness checking."""
    x = x_nchw.astype(jnp.float32)
    w = params["conv_weight"].astype(jnp.float32)
    if round_inputs_to_bf16:
        x = x.astype(jnp.bfloat16).astype(jnp.float32)
        w = w.astype(jnp.bfloat16).astype(jnp.float32)
    cb = params["conv_bias"]
    gamma, beta = params["bn_gamma"], params["bn_beta"]
    mean, var, eps = params["bn_running_mean"], params["bn_running_var"], params["bn_eps"]
    z = jax.lax.conv_general_dilated(
        x, w, window_strides=(1, 1), padding=((1, 1), (1, 1)),
        dimension_numbers=("NCHW", "OIHW", "NCHW"),
        precision=jax.lax.Precision.HIGHEST,
    ) + cb[None, :, None, None]
    z = (z - mean[None, :, None, None]) / jnp.sqrt(var[None, :, None, None] + eps)
    z = z * gamma[None, :, None, None] + beta[None, :, None, None]
    return jnp.maximum(z, 0.0)


if __name__ == "__main__":
    key = jax.random.PRNGKey(0)
    k_x, k_w, k_b, k_g, k_be, k_m, k_v = jax.random.split(key, 7)

    N, Cin, H, W = 2, 4, 16, 16
    Cout = 8

    x = jax.random.normal(k_x, (N, Cin, H, W), dtype=jnp.float32)

    params = {
        "conv_weight": 0.1 * jax.random.normal(k_w, (Cout, Cin, 3, 3), jnp.float32),
        "conv_bias": 0.05 * jax.random.normal(k_b, (Cout,), jnp.float32),
        "bn_gamma": 1.0 + 0.1 * jax.random.normal(k_g, (Cout,), jnp.float32),
        "bn_beta": 0.1 * jax.random.normal(k_be, (Cout,), jnp.float32),
        "bn_running_mean": 0.1 * jax.random.normal(k_m, (Cout,), jnp.float32),
        "bn_running_var": 1.0 + 0.1 * jax.random.uniform(k_v, (Cout,), jnp.float32),
        "bn_eps": 1e-5,
    }

    y = conv_module_forward(x, params)
    y = jax.block_until_ready(y)
    assert y.shape == (N, Cout, H, W)

    # Tight check vs. a reference whose matmul inputs are bf16-rounded the same way the
    # kernel rounds them (kernel accumulates in f32, so this matches closely).
    y_ref_bf16 = _reference_forward(x, params, round_inputs_to_bf16=True)
    assert jnp.allclose(y, y_ref_bf16, atol=1e-3, rtol=1e-3), "mismatch vs bf16-input reference"

    # Loose check vs. full-f32 PyTorch-module semantics (difference is only the bf16
    # rounding of the patch/weights feeding the MXU).
    y_ref_f32 = _reference_forward(x, params, round_inputs_to_bf16=False)
    assert jnp.allclose(y, y_ref_f32, atol=2e-2, rtol=2e-2), "mismatch vs f32 reference"

    print("KERNEL_OK")
</pallas_src>

<mosaic_0001>
module attributes {stable_mosaic.version = 11 : i64} {
  func.func @_conv_bn_relu_kernel(%arg0: i32, %arg1: memref<1x4x256xf32, #tpu.memory_space<vmem>>, %arg2: memref<8x72xbf16, #tpu.memory_space<vmem>>, %arg3: memref<8x1xf32, #tpu.memory_space<vmem>>, %arg4: memref<8x1xf32, #tpu.memory_space<vmem>>, %arg5: memref<1x8x256xf32, #tpu.memory_space<vmem>>, %arg6: memref<8x512xf32, #tpu.memory_space<vmem>>, %arg7: memref<72x256xf32, #tpu.memory_space<vmem>>) attributes {dimension_semantics = [#tpu.dimension_semantics<parallel>], iteration_bounds = array<i64: 2>, scalar_prefetch = 0 : i64, scratch_operands = 2 : i64, tpu.core_type = #tpu.core_type<tc>, window_params = [{transform_indices = @transform_0, window_bounds = array<i64: 1, 4, 256>}, {pipeline_mode = #tpu.pipeline_mode<synchronous>, transform_indices = @transform_1, window_bounds = array<i64: 8, 72>}, {pipeline_mode = #tpu.pipeline_mode<synchronous>, transform_indices = @transform_2, window_bounds = array<i64: 8, 1>}, {pipeline_mode = #tpu.pipeline_mode<synchronous>, transform_indices = @transform_3, window_bounds = array<i64: 8, 1>}, {transform_indices = @transform_4, window_bounds = array<i64: 1, 8, 256>}]} {
    %cst = arith.constant 0.000000e+00 : f32
    %0 = vector.broadcast %cst : f32 to vector<8x512xf32>
    %c0 = arith.constant 0 : index
    %c0_0 = arith.constant 0 : index
    %1 = vector.load %arg6[%c0, %c0_0] : memref<8x512xf32, #tpu.memory_space<vmem>>, vector<8x512xf32>
    tpu.vector_store %arg6[%c0, %c0_0], %0 {strides = array<i32>} : memref<8x512xf32, #tpu.memory_space<vmem>>, vector<8x512xf32>,
    %c0_1 = arith.constant 0 : index
    %c0_2 = arith.constant 0 : index
    %c0_3 = arith.constant 0 : index
    %2 = vector.load %arg1[%c0_1, %c0_2, %c0_3] : memref<1x4x256xf32, #tpu.memory_space<vmem>>, vector<1x4x256xf32>
    %3 = vector.shape_cast %2 : vector<1x4x256xf32> to vector<4x256xf32>
    %c0_4 = arith.constant 0 : index
    %c128 = arith.constant 128 : index
    %4 = vector.load %arg6[%c0_4, %c128] : memref<8x512xf32, #tpu.memory_space<vmem>>, vector<4x256xf32>
    tpu.vector_store %arg6[%c0_4, %c128], %3 {strides = array<i32>} : memref<8x512xf32, #tpu.memory_space<vmem>>, vector<4x256xf32>,
    %5 = tpu.iota {dimensions = array<i32: 1>} : vector<1x256xi32>
    %c16_i32 = arith.constant 16 : i32
    %c0_i32 = arith.constant 0 : i32
    %6 = arith.cmpi eq, %c16_i32, %c0_i32 : i32
    %c1_i32 = arith.constant 1 : i32
    %7 = arith.select %6, %c1_i32, %c16_i32 : i32
    %8 = vector.broadcast %7 : i32 to vector<1x256xi32>
    %9 = arith.remsi %5, %8 : vector<1x256xi32>
    %c0_i32_5 = arith.constant 0 : i32
    %10 = vector.broadcast %c0_i32_5 : i32 to vector<1x256xi32>
    %11 = arith.cmpi ne, %9, %10 : vector<1x256xi32>
    %c0_i32_6 = arith.constant 0 : i32
    %12 = vector.broadcast %c0_i32_6 : i32 to vector<1x256xi32>
    %13 = arith.cmpi slt, %9, %12 : vector<1x256xi32>
    %c0_i32_7 = arith.constant 0 : i32
    %14 = arith.cmpi slt, %7, %c0_i32_7 : i32
    %15 = vector.broadcast %14 : i1 to vector<1x256xi1>
    %16 = vector.broadcast %15 : vector<1x256xi1> to vector<1x256xi1>
    %17 = arith.xori %13, %16 : vector<1x256xi1>
    %18 = arith.andi %17, %11 : vector<1x256xi1>
    %19 = vector.broadcast %7 : i32 to vector<1x256xi32>
    %20 = arith.addi %9, %19 : vector<1x256xi32>
    %21 = arith.select %18, %20, %9 : vector<1x256xi1>, vector<1x256xi32>
    %c1_i32_8 = arith.constant 1 : i32
    %22 = vector.broadcast %c1_i32_8 : i32 to vector<1x256xi32>
    %23 = arith.cmpi sge, %21, %22 : vector<1x256xi32>
    %c14_i32 = arith.constant 14 : i32
    %24 = vector.broadcast %c14_i32 : i32 to vector<1x256xi32>
    %25 = arith.cmpi sle, %21, %24 : vector<1x256xi32>
    %c0_9 = arith.constant 0 : index
    %c111 = arith.constant 111 : index
    %26 = vector.load %arg6[%c0_9, %c111] : memref<8x512xf32, #tpu.memory_space<vmem>>, vector<8x256xf32>
    %cst_10 = arith.constant 0.000000e+00 : f32
    %27 = vector.shape_cast %23 : vector<1x256xi1> to vector<1x256xi1>
    %28 = vector.broadcast %27 : vector<1x256xi1> to vector<8x256xi1>
    %29 = vector.broadcast %cst_10 : f32 to vector<8x256xf32>
    %30 = arith.select %28, %26, %29 : vector<8x256xi1>, vector<8x256xf32>
    %c0_11 = arith.constant 0 : index
    %c0_12 = arith.constant 0 : index
    %31 = vector.load %arg7[%c0_11, %c0_12] : memref<72x256xf32, #tpu.memory_space<vmem>>, vector<8x256xf32>
    tpu.vector_store %arg7[%c0_11, %c0_12], %30 {strides = array<i32>} : memref<72x256xf32, #tpu.memory_space<vmem>>, vector<8x256xf32>,
    %c0_13 = arith.constant 0 : index
    %c112 = arith.constant 112 : index
    %32 = vector.load %arg6[%c0_13, %c112] : memref<8x512xf32, #tpu.memory_space<vmem>>, vector<8x256xf32>
    %c8 = arith.constant 8 : index
    %c0_14 = arith.constant 0 : index
    %33 = vector.load %arg7[%c8, %c0_14] : memref<72x256xf32, #tpu.memory_space<vmem>>, vector<8x256xf32>
    tpu.vector_store %arg7[%c8, %c0_14], %32 {strides = array<i32>} : memref<72x256xf32, #tpu.memory_space<vmem>>, vector<8x256xf32>,
    %c0_15 = arith.constant 0 : index
    %c113 = arith.constant 113 : index
    %34 = vector.load %arg6[%c0_15, %c113] : memref<8x512xf32, #tpu.memory_space<vmem>>, vector<8x256xf32>
    %cst_16 = arith.constant 0.000000e+00 : f32
    %35 = vector.shape_cast %25 : vector<1x256xi1> to vector<1x256xi1>
    %36 = vector.broadcast %35 : vector<1x256xi1> to vector<8x256xi1>
    %37 = vector.broadcast %cst_16 : f32 to vector<8x256xf32>
    %38 = arith.select %36, %34, %37 : vector<8x256xi1>, vector<8x256xf32>
    %c16 = arith.constant 16 : index
    %c0_17 = arith.constant 0 : index
    %39 = vector.load %arg7[%c16, %c0_17] : memref<72x256xf32, #tpu.memory_space<vmem>>, vector<8x256xf32>
    tpu.vector_store %arg7[%c16, %c0_17], %38 {strides = array<i32>} : memref<72x256xf32, #tpu.memory_space<vmem>>, vector<8x256xf32>,
    %c0_18 = arith.constant 0 : index
    %c127 = arith.constant 127 : index
    %40 = vector.load %arg6[%c0_18, %c127] : memref<8x512xf32, #tpu.memory_space<vmem>>, vector<8x256xf32>
    %cst_19 = arith.constant 0.000000e+00 : f32
    %41 = vector.shape_cast %23 : vector<1x256xi1> to vector<1x256xi1>
    %42 = vector.broadcast %41 : vector<1x256xi1> to vector<8x256xi1>
    %43 = vector.broadcast %cst_19 : f32 to vector<8x256xf32>
    %44 = arith.select %42, %40, %43 : vector<8x256xi1>, vector<8x256xf32>
    %c24 = arith.constant 24 : index
    %c0_20 = arith.constant 0 : index
    %45 = vector.load %arg7[%c24, %c0_20] : memref<72x256xf32, #tpu.memory_space<vmem>>, vector<8x256xf32>
    tpu.vector_store %arg7[%c24, %c0_20], %44 {strides = array<i32>} : memref<72x256xf32, #tpu.memory_space<vmem>>, vector<8x256xf32>,
    %c0_21 = arith.constant 0 : index
    %c128_22 = arith.constant 128 : index
    %46 = vector.load %arg6[%c0_21, %c128_22] : memref<8x512xf32, #tpu.memory_space<vmem>>, vector<8x256xf32>
    %c32 = arith.constant 32 : index
    %c0_23 = arith.constant 0 : index
    %47 = vector.load %arg7[%c32, %c0_23] : memref<72x256xf32, #tpu.memory_space<vmem>>, vector<8x256xf32>
    tpu.vector_store %arg7[%c32, %c0_23], %46 {strides = array<i32>} : memref<72x256xf32, #tpu.memory_space<vmem>>, vector<8x256xf32>,
    %c0_24 = arith.constant 0 : index
    %c129 = arith.constant 129 : index
    %48 = vector.load %arg6[%c0_24, %c129] : memref<8x512xf32, #tpu.memory_space<vmem>>, vector<8x256xf32>
    %cst_25 = arith.constant 0.000000e+00 : f32
    %49 = vector.shape_cast %25 : vector<1x256xi1> to vector<1x256xi1>
    %50 = vector.broadcast %49 : vector<1x256xi1> to vector<8x256xi1>
    %51 = vector.broadcast %cst_25 : f32 to vector<8x256xf32>
    %52 = arith.select %50, %48, %51 : vector<8x256xi1>, vector<8x256xf32>
    %c40 = arith.constant 40 : index
    %c0_26 = arith.constant 0 : index
    %53 = vector.load %arg7[%c40, %c0_26] : memref<72x256xf32, #tpu.memory_space<vmem>>, vector<8x256xf32>
    tpu.vector_store %arg7[%c40, %c0_26], %52 {strides = array<i32>} : memref<72x256xf32, #tpu.memory_space<vmem>>, vector<8x256xf32>,
    %c0_27 = arith.constant 0 : index
    %c143 = arith.constant 143 : index
    %54 = vector.load %arg6[%c0_27, %c143] : memref<8x512xf32, #tpu.memory_space<vmem>>, vector<8x256xf32>
    %cst_28 = arith.constant 0.000000e+00 : f32
    %55 = vector.shape_cast %23 : vector<1x256xi1> to vector<1x256xi1>
    %56 = vector.broadcast %55 : vector<1x256xi1> to vector<8x256xi1>
    %57 = vector.broadcast %cst_28 : f32 to vector<8x256xf32>
    %58 = arith.select %56, %54, %57 : vector<8x256xi1>, vector<8x256xf32>
    %c48 = arith.constant 48 : index
    %c0_29 = arith.constant 0 : index
    %59 = vector.load %arg7[%c48, %c0_29] : memref<72x256xf32, #tpu.memory_space<vmem>>, vector<8x256xf32>
    tpu.vector_store %arg7[%c48, %c0_29], %58 {strides = array<i32>} : memref<72x256xf32, #tpu.memory_space<vmem>>, vector<8x256xf32>,
    %c0_30 = arith.constant 0 : index
    %c144 = arith.constant 144 : index
    %60 = vector.load %arg6[%c0_30, %c144] : memref<8x512xf32, #tpu.memory_space<vmem>>, vector<8x256xf32>
    %c56 = arith.constant 56 : index
    %c0_31 = arith.constant 0 : index
    %61 = vector.load %arg7[%c56, %c0_31] : memref<72x256xf32, #tpu.memory_space<vmem>>, vector<8x256xf32>
    tpu.vector_store %arg7[%c56, %c0_31], %60 {strides = array<i32>} : memref<72x256xf32, #tpu.memory_space<vmem>>, vector<8x256xf32>,
    %c0_32 = arith.constant 0 : index
    %c145 = arith.constant 145 : index
    %62 = vector.load %arg6[%c0_32, %c145] : memref<8x512xf32, #tpu.memory_space<vmem>>, vector<8x256xf32>
    %cst_33 = arith.constant 0.000000e+00 : f32
    %63 = vector.shape_cast %25 : vector<1x256xi1> to vector<1x256xi1>
    %64 = vector.broadcast %63 : vector<1x256xi1> to vector<8x256xi1>
    %65 = vector.broadcast %cst_33 : f32 to vector<8x256xf32>
    %66 = arith.select %64, %62, %65 : vector<8x256xi1>, vector<8x256xf32>
    %c64 = arith.constant 64 : index
    %c0_34 = arith.constant 0 : index
    %67 = vector.load %arg7[%c64, %c0_34] : memref<72x256xf32, #tpu.memory_space<vmem>>, vector<8x256xf32>
    tpu.vector_store %arg7[%c64, %c0_34], %66 {strides = array<i32>} : memref<72x256xf32, #tpu.memory_space<vmem>>, vector<8x256xf32>,
    %c0_35 = arith.constant 0 : index
    %c0_36 = arith.constant 0 : index
    %68 = vector.load %arg2[%c0_35, %c0_36] : memref<8x72xbf16, #tpu.memory_space<vmem>>, vector<8x72xbf16>
    %c0_37 = arith.constant 0 : index
    %c0_38 = arith.constant 0 : index
    %69 = vector.load %arg7[%c0_37, %c0_38] : memref<72x256xf32, #tpu.memory_space<vmem>>, vector<72x256xf32>
    %70 = arith.truncf %69 : vector<72x256xf32> to vector<72x256xbf16>
    %cst_39 = arith.constant dense<0.000000e+00> : vector<8x256xf32>
    %71 = tpu.matmul %68, %70, %cst_39 {dimension_numbers = #tpu.dot_dimension_numbers<[1], [0], [0], [1], [0, 0, 1, 1], [], []>} : vector<8x72xbf16>, vector<72x256xbf16>, vector<8x256xf32> -> vector<8x256xf32>
    %c0_40 = arith.constant 0 : index
    %c0_41 = arith.constant 0 : index
    %72 = vector.load %arg3[%c0_40, %c0_41] : memref<8x1xf32, #tpu.memory_space<vmem>>, vector<8x1xf32>
    %73 = vector.broadcast %72 : vector<8x1xf32> to vector<8x256xf32>
    %74 = arith.mulf %71, %73 : vector<8x256xf32>
    %c0_42 = arith.constant 0 : index
    %c0_43 = arith.constant 0 : index
    %75 = vector.load %arg4[%c0_42, %c0_43] : memref<8x1xf32, #tpu.memory_space<vmem>>, vector<8x1xf32>
    %76 = vector.broadcast %75 : vector<8x1xf32> to vector<8x256xf32>
    %77 = arith.addf %74, %76 : vector<8x256xf32>
    %cst_44 = arith.constant 0.000000e+00 : f32
    %78 = vector.broadcast %cst_44 : f32 to vector<8x256xf32>
    %79 = arith.maximumf %77, %78 : vector<8x256xf32>
    %c0_45 = arith.constant 0 : index
    %c0_46 = arith.constant 0 : index
    %c0_47 = arith.constant 0 : index
    %80 = vector.load %arg5[%c0_45, %c0_46, %c0_47] : memref<1x8x256xf32, #tpu.memory_space<vmem>>, vector<1x8x256xf32>
    %81 = vector.shape_cast %80 : vector<1x8x256xf32> to vector<8x256xf32>
    %82 = vector.shape_cast %79 : vector<8x256xf32> to vector<1x8x256xf32>
    tpu.vector_store %arg5[%c0_45, %c0_46, %c0_47], %82 {strides = array<i32>} : memref<1x8x256xf32, #tpu.memory_space<vmem>>, vector<1x8x256xf32>,
    return
  }
  func.func @transform_0(%arg0: i32) -> (i32, i32, i32) {
    %c0_i32 = arith.constant 0 : i32
    %c0_i32_0 = arith.constant 0 : i32
    %c0_i32_1 = arith.constant 0 : i32
    return %arg0, %c0_i32, %c0_i32_0 : i32, i32, i32
  }
  func.func @transform_1(%arg0: i32) -> (i32, i32) {
    %c0_i32 = arith.constant 0 : i32
    %c0_i32_0 = arith.constant 0 : i32
    %c0_i32_1 = arith.constant 0 : i32
    return %c0_i32, %c0_i32_0 : i32, i32
  }
  func.func @transform_2(%arg0: i32) -> (i32, i32) {
    %c0_i32 = arith.constant 0 : i32
    %c0_i32_0 = arith.constant 0 : i32
    %c0_i32_1 = arith.constant 0 : i32
    return %c0_i32, %c0_i32_0 : i32, i32
  }
  func.func @transform_3(%arg0: i32) -> (i32, i32) {
    %c0_i32 = arith.constant 0 : i32
    %c0_i32_0 = arith.constant 0 : i32
    %c0_i32_1 = arith.constant 0 : i32
    return %c0_i32, %c0_i32_0 : i32, i32
  }
  func.func @transform_4(%arg0: i32) -> (i32, i32, i32) {
    %c0_i32 = arith.constant 0 : i32
    %c0_i32_0 = arith.constant 0 : i32
    %c0_i32_1 = arith.constant 0 : i32
    return %arg0, %c0_i32, %c0_i32_0 : i32, i32, i32
  }
}

</mosaic_0001>

<llo_original>
// kernel: tpu_custom_call.1
$region0: #{tpu_custom_call.1}
  #allocation0 [shape = 'u32[]', space=smem, size = 0x4, offset = 0x4, fixed_abs, tag = 'smem constant byte address 0x4 - core index']
  #allocation1 [shape = 'u32[72,128]{1,0:T(1,128)}', space=vmem, size = 0x9000, scoped, tag = 'internal scratch']
  #allocation2 [shape = 'f32[8,512]{1,0:T(8,128)}', space=vmem, size = 0x4000, scoped, tag = 'scratch operand']
  #allocation3 [shape = 'f32[72,256]{1,0:T(8,128)}', space=vmem, size = 0x12000, scoped, tag = 'scratch operand']
  %s0 = inlined_call_operand.vmem [shape: f32[2,4,256], index: 0, kind: input, shape index: {}]
  %s1 = inlined_call_operand.hbm [shape: bf16[8,72], index: 1, kind: input, shape index: {}]
  %s2 = inlined_call_operand.vmem [shape: f32[8,1], index: 2, kind: input, shape index: {}]
  %s3 = inlined_call_operand.vmem [shape: f32[8,1], index: 3, kind: input, shape index: {}]
  %s4 = inlined_call_operand.hbm [shape: f32[2,8,256], index: 4, kind: output, shape index: {}]
  %s5 = sld [smem:[#allocation0]]
  $region53: #{tpu_custom_call.1} parent=0
    _
  %s7 = ssub.s32 1, %s5
  %s8 = scalar_select 0, %s7, %s5
  $region1: #{tpu_custom_call.1} parent=0
    #allocation4 [shape = 'u8[2048]{0}', space=vmem, size = 0x800, scoped, tag = 'input window, operand 1, single buffered']
    #allocation5 [shape = 's32[2]{0}', space=sflag, size = 0x8, scoped, tag = 'scoped memory for tpu_custom_call.1']
    #allocation6 [shape = 's32[2]{0}', space=sflag, size = 0x8, scoped, tag = 'scoped memory for tpu_custom_call.1']
    #allocation7 [shape = 'u8[16384]{0}', space=vmem, size = 0x4000, scoped, tag = 'output window, operand 0']
    %9 = vsyncpa [#allocation5], 0
    %10 = vsyncpa [#allocation6], 0
    %s11 = scalar_lea.sflag [#allocation6], 1
    %12 = vsyncpa %s11, 0
    loop: start=0, step=1, limit=4
    $region2: #{tpu_custom_call.1} parent=1 // loop_pre_header
      _
    $region3: #{tpu_custom_call.1} parent=1 // loop_header
      %s14 = sphi 0, %s18
      %p15 = scmp.ge.s32.totalorder %s14, 4
      %s24 = sphi 0, %s26
      %s27 = sphi 0, %s24
      %s28 = sphi 0, %s27
      %s44 = sphi 0, %s28
      %s48 = sphi 0, %s48
      %s50 = sphi 0, %s48
      %s51 = sphi 0, %s50
      %s65 = sphi 0, %s51
      %s69 = sphi 0, %s69
      %s71 = sphi 0, %s69
      %s72 = sphi 0, %s71
      %s86 = sphi 0, %s72
      %s90 = sphi 0, %s90
      %s92 = sphi 0, %s90
      %s93 = sphi 0, %s92
      %s107 = sphi 0, %s93
      %s113 = sphi 0, %s115
      %s116 = sphi 0, %s113
      %s117 = sphi 0, %s116
      %s133 = sphi 0, %s117
    $region4: #{tpu_custom_call.1} parent=1 // loop_header_branch
      %17 = sbr.rel (%p15) target = $region8
    $region5: #{tpu_custom_call.1} parent=1 // loop_body
      %s19 = ssub.s32 %s14, 1
      %s20 = ssub.s32 %s14, 2
      %s21 = sadd.s32 %s14, 1
      %s22 = ssub.s32 %s14, %s21
      %p23 = scmp.eq.s32.totalorder %s22, 0
      %s25 = sadd.s32 %s24, 1
      %s26 = scalar_select %p23, %s24, %s25
      %p29 = pneg %p23
      %p30 = scmp.eq.s32.totalorder %s14, 1
      %p31 = por %p29, %p30
      %p32 = scmp.ne.s32.totalorder %s24, %s27
      %p33 = scmp.eq.s32.totalorder %s14, 0
      %p34 = por %p32, %p33
      %p35 = scmp.ne.s32.totalorder %s24, %s27
      %p36 = scmp.eq.s32.totalorder %s19, 1
      %p37 = por %p35, %p36
      %p38 = scmp.ne.s32.totalorder %s27, %s28
      %p39 = scmp.eq.s32.totalorder %s19, 0
      %p40 = por %p38, %p39
      %p41 = scmp.ne.s32.totalorder %s27, %s28
      %p42 = scmp.eq.s32.totalorder %s20, 1
      %p43 = por %p41, %p42
      %p45 = scmp.ne.s32.totalorder %s28, %s44
      %p46 = scmp.eq.s32.totalorder %s20, 0
      %p47 = por %p45, %p46
      %s49 = sadd.s32 %s48, 1
      %p52 = scmp.eq.s32.totalorder %s14, 1
      %p53 = scmp.ne.s32.totalorder %s48, %s50
      %p54 = scmp.eq.s32.totalorder %s14, 0
      %p55 = por %p53, %p54
      %p56 = scmp.ne.s32.totalorder %s48, %s50
      %p57 = scmp.eq.s32.totalorder %s19, 1
      %p58 = por %p56, %p57
      %p59 = scmp.ne.s32.totalorder %s50, %s51
      %p60 = scmp.eq.s32.totalorder %s19, 0
      %p61 = por %p59, %p60
      %p62 = scmp.ne.s32.totalorder %s50, %s51
      %p63 = scmp.eq.s32.totalorder %s20, 1
      %p64 = por %p62, %p63
      %p66 = scmp.ne.s32.totalorder %s51, %s65
      %p67 = scmp.eq.s32.totalorder %s20, 0
      %p68 = por %p66, %p67
      %s70 = sadd.s32 %s69, 1
      %p73 = scmp.eq.s32.totalorder %s14, 1
      %p74 = scmp.ne.s32.totalorder %s69, %s71
      %p75 = scmp.eq.s32.totalorder %s14, 0
      %p76 = por %p74, %p75
      %p77 = scmp.ne.s32.totalorder %s69, %s71
      %p78 = scmp.eq.s32.totalorder %s19, 1
      %p79 = por %p77, %p78
      %p80 = scmp.ne.s32.totalorder %s71, %s72
      %p81 = scmp.eq.s32.totalorder %s19, 0
      %p82 = por %p80, %p81
      %p83 = scmp.ne.s32.totalorder %s71, %s72
      %p84 = scmp.eq.s32.totalorder %s20, 1
      %p85 = por %p83, %p84
      %p87 = scmp.ne.s32.totalorder %s72, %s86
      %p88 = scmp.eq.s32.totalorder %s20, 0
      %p89 = por %p87, %p88
      %s91 = sadd.s32 %s90, 1
      %p94 = scmp.eq.s32.totalorder %s14, 1
      %p95 = scmp.ne.s32.totalorder %s90, %s92
      %p96 = scmp.eq.s32.totalorder %s14, 0
      %p97 = por %p95, %p96
      %p98 = scmp.ne.s32.totalorder %s90, %s92
      %p99 = scmp.eq.s32.totalorder %s19, 1
      %p100 = por %p98, %p99
      %p101 = scmp.ne.s32.totalorder %s92, %s93
      %p102 = scmp.eq.s32.totalorder %s19, 0
      %p103 = por %p101, %p102
      %p104 = scmp.ne.s32.totalorder %s92, %s93
      %p105 = scmp.eq.s32.totalorder %s20, 1
      %p106 = por %p104, %p105
      %p108 = scmp.ne.s32.totalorder %s93, %s107
      %p109 = scmp.eq.s32.totalorder %s20, 0
      %p110 = por %p108, %p109
      %s111 = ssub.s32 %s14, %s21
      %p112 = scmp.eq.s32.totalorder %s111, 0
      %s114 = sadd.s32 %s113, 1
      %s115 = scalar_select %p112, %s113, %s114
      %p118 = pneg %p112
      %p119 = scmp.eq.s32.totalorder %s14, 1
      %p120 = por %p118, %p119
      %p121 = scmp.ne.s32.totalorder %s113, %s116
      %p122 = scmp.eq.s32.totalorder %s14, 0
      %p123 = por %p121, %p122
      %p124 = scmp.ne.s32.totalorder %s113, %s116
      %p125 = scmp.eq.s32.totalorder %s19, 1
      %p126 = por %p124, %p125
      %p127 = scmp.ne.s32.totalorder %s116, %s117
      %p128 = scmp.eq.s32.totalorder %s19, 0
      %p129 = por %p127, %p128
      %p130 = scmp.ne.s32.totalorder %s116, %s117
      %p131 = scmp.eq.s32.totalorder %s20, 1
      %p132 = por %p130, %p131
      %p134 = scmp.ne.s32.totalorder %s117, %s133
      %p135 = scmp.eq.s32.totalorder %s20, 0
      %p136 = por %p134, %p135
      %p137 = scmp.le.s32.totalorder 1, %s14
      %p138 = scmp.lt.s32.totalorder %s14, 3
      %p139 = pnand %p137, %p138
      %p140 = pneg %p139
      // Predicated region
      $region9: #{tpu_custom_call.1} parent=5 // pred_check
        _
      $region10: #{tpu_custom_call.1} parent=5 // pred_check_branch
        %142 = sbr.rel (%p139) target = $region12
      $region11: #{tpu_custom_call.1} parent=5 // pred_region
        %s143 = ssub.s32 %s14, 1
        // Predicated region
        $region13: #{tpu_custom_call.1} parent=11 // pred_check
          %p144 = pneg %p61
        $region14: #{tpu_custom_call.1} parent=11 // pred_check_branch
          %146 = sbr.rel (%p144) target = $region16
        $region15: #{tpu_custom_call.1} parent=11 // pred_region
          %148 = vsyncadd [#allocation5], 0
          %s150 = sshll.u32 %s1, 4
          %s151 = int_to_ptr.hbm [resolvable:$true] %s150
          %s152 = sshll.u32 [#allocation4], 4
          %s153 = int_to_ptr.vmem [resolvable:$true] %s152
          %155 = dma.hbm_to_vmem [thread:$0]  %s151, 64, %s153, [#allocation5]
        $region16: #{tpu_custom_call.1} parent=11 // pred_fallthru
          _
        // Predicated region
        $region17: #{tpu_custom_call.1} parent=11 // pred_check
          %p156 = pneg %p82
        $region18: #{tpu_custom_call.1} parent=11 // pred_check_branch
          %158 = sbr.rel (%p156) target = $region20
        $region19: #{tpu_custom_call.1} parent=11 // pred_region
          _
        $region20: #{tpu_custom_call.1} parent=11 // pred_fallthru
          _
        // Predicated region
        $region21: #{tpu_custom_call.1} parent=11 // pred_check
          %p159 = pneg %p103
        $region22: #{tpu_custom_call.1} parent=11 // pred_check_branch
          %161 = sbr.rel (%p159) target = $region24
        $region23: #{tpu_custom_call.1} parent=11 // pred_region
          _
        $region24: #{tpu_custom_call.1} parent=11 // pred_fallthru
          _
      $region12: #{tpu_custom_call.1} parent=5 // pred_fallthru
        _
      %p162 = scmp.lt.s32.totalorder %s14, 2
      // Predicated region
      $region25: #{tpu_custom_call.1} parent=5 // pred_check
        %p163 = pneg %p162
      $region26: #{tpu_custom_call.1} parent=5 // pred_check_branch
        %165 = sbr.rel (%p163) target = $region28
      $region27: #{tpu_custom_call.1} parent=5 // pred_region
        // Predicated region
        $region29: #{tpu_custom_call.1} parent=27 // pred_check
          %p166 = pneg %p34
        $region30: #{tpu_custom_call.1} parent=27 // pred_check_branch
          %168 = sbr.rel (%p166) target = $region32
        $region31: #{tpu_custom_call.1} parent=27 // pred_region
          %p169 = scmp.lt.s32.totalorder %s14, 1
          %s170 = scalar_select %p169, %s14, 1
          %s171 = smul.addr %s170, 2
          %s172 = smul.addr %s171, 4
          %s173 = scalar_lea.vmem %s0, %s172
        $region32: #{tpu_custom_call.1} parent=27 // pred_fallthru
          _
      $region28: #{tpu_custom_call.1} parent=5 // pred_fallthru
        _
      %p174 = scmp.le.s32.totalorder 1, %s14
      %p175 = scmp.lt.s32.totalorder %s14, 3
      %p176 = pnand %p174, %p175
      %p177 = pneg %p176
      // Predicated region
      $region33: #{tpu_custom_call.1} parent=5 // pred_check
        _
      $region34: #{tpu_custom_call.1} parent=5 // pred_check_branch
        %179 = sbr.rel (%p176) target = $region36
      $region35: #{tpu_custom_call.1} parent=5 // pred_region
        %s180 = ssub.s32 %s14, 1
        // Predicated region
        $region37: #{tpu_custom_call.1} parent=35 // pred_check
          %p181 = pneg %p61
        $region38: #{tpu_custom_call.1} parent=35 // pred_check_branch
          %183 = sbr.rel (%p181) target = $region40
        $region39: #{tpu_custom_call.1} parent=35 // pred_region
          %185 = dma.done [#allocation5], 64
        $region40: #{tpu_custom_call.1} parent=35 // pred_fallthru
          _
        %p186 = scmp.lt.s32.totalorder %s19, 1
        %s187 = scalar_select %p186, %s19, 1
        %s188 = smul.addr %s187, 2
        %s189 = smul.addr %s188, 4
        %s190 = scalar_lea.vmem %s0, %s189
        %p191 = pneg %p40
        %p192 = pneg %p37
        %p193 = pneg %p61
        %p194 = pneg %p58
        %p195 = pneg %p82
        %p196 = pneg %p79
        %p197 = pneg %p103
        %p198 = pneg %p100
        %p199 = pneg %p129
        %p200 = pneg %p126
        %s201 = sand.u32 %s116, 1
        %s202 = scalar_lea.sflag [#allocation6], %s201
        %s203 = sand.u32 %s116, 1
        %s204 = smul.addr %s203, 16
        %s205 = scalar_lea.vmem [#allocation7], %s204
        %p206 = scmp.lt.s32.totalorder %s19, 1
        %s207 = scalar_select %p206, %s19, 1
        %s208 = smul.addr %s207, 2
        %s209 = smul.addr %s208, 4
        %s210 = scalar_lea.vmem %s0, %s209
        %212 = vst [vmem:[#allocation2] sm:$0xff] 0.0
        %213 = vst [vmem:[#allocation2 + $0x8] sm:$0xff] 0.0
        %214 = vst [vmem:[#allocation2 + $0x10] sm:$0xff] 0.0
        %215 = vst [vmem:[#allocation2 + $0x18] sm:$0xff] 0.0
        %v216 = vld [vmem:[%s210] sm:$0xff]
        %218 = vst [vmem:[#allocation1] ss:$2 sm:$0xff] %v216
        %v219 = vld.sshfl [vmem:[#allocation1] sm:$0xff pattern:$0x75316420]
        %v220 = vld.sshfl [vmem:[#allocation1 + $0x8] sm:$0xff pattern:$0x75316420]
        %223 = vst [vmem:[#allocation2 + $0x8] sm:$0xf] %v219
        %224 = vst [vmem:[#allocation2 + $0x10] sm:$0xf] %v220
        %v225 = vlaneseq
        %v226 = vand.u32 %v225, 127
        %v227 = vadd.s32 %v226, 128
        %vm228 = vcmp.lt.s32.totalorder %v226, 0
        %v229 = vsub.s32 0, %v226
        %v230 = vsel %vm228, %v229, %v226
        %v231 = vshrl.u32 %v230, 4
        %v232 = vand.u32 %v230, 15
        %v233 = vsub.s32 0, %v232
        %v234 = vsel %vm228, %v233, %v232
        %vm235 = vcmp.lt.s32.totalorder %v227, 0
        %v236 = vsub.s32 0, %v227
        %v237 = vsel %vm235, %v236, %v227
        %v238 = vshrl.u32 %v237, 4
        %v239 = vand.u32 %v237, 15
        %v240 = vsub.s32 0, %v239
        %v241 = vsel %vm235, %v240, %v239
        %vm242 = vcmp.ne.s32.totalorder %v234, 0
        %vm243 = vcmp.ne.s32.totalorder %v241, 0
        %vm244 = vcmp.lt.s32.totalorder %v234, 0
        %vm245 = vcmp.lt.s32.totalorder %v241, 0
        %vm246 = vmand %vm244, %vm242
        %vm247 = vmand %vm245, %vm243
        %v248 = vadd.s32 %v234, 16
        %v249 = vadd.s32 %v241, 16
        %v250 = vsel %vm246, %v248, %v234
        %v251 = vsel %vm247, %v249, %v241
        %vm252 = vcmp.ge.s32.totalorder %v250, 1
        %vm253 = vcmp.ge.s32.totalorder %v251, 1
        %vm254 = vcmp.le.s32.totalorder %v250, 14
        %vm255 = vcmp.le.s32.totalorder %v251, 14
        %v256 = vld [vmem:[#allocation2] sm:$0xff]
        %v257 = vld [vmem:[#allocation2 + $0x8] sm:$0xff]
        %v258 = vld [vmem:[#allocation2 + $0x10] sm:$0xff]
        %v259 = vsel %vm252, 1, 0
        %v260 = vsel %vm253, 1, 0
        %vm261 = vcmp.eq.s32.totalorder %v259, 1
        %vm262 = vcmp.eq.s32.totalorder %v260, 1
        %266 = vrot.lane.b32.xlu0 %v256, 17
        %v267 = vpop.permute.xlu0 %266
        %268 = vrot.lane.b32.xlu0 %v257, 17
        %v269 = vpop.permute.xlu0 %268
        %270 = vrot.lane.b32.xlu0 %v258, 17
        %v271 = vpop.permute.xlu0 %270
        %vm272 = vcmask 138240
        %v273 = vsel %vm272, %v267, %v269
        %v274 = vsel %vm272, %v269, %v271
        %v277 = vsel %vm261, %v273, 0.0
        %v278 = vsel %vm262, %v274, 0.0
        %279 = vst [vmem:[#allocation3] sm:$0xff] %v277
        %280 = vst [vmem:[#allocation3 + $0x8] sm:$0xff] %v278
        %v281 = vld [vmem:[#allocation2] sm:$0xff]
        %v282 = vld [vmem:[#allocation2 + $0x8] sm:$0xff]
        %v283 = vld [vmem:[#allocation2 + $0x10] sm:$0xff]
        %287 = vrot.lane.b32.xlu0 %v281, 16
        %v288 = vpop.permute.xlu0 %287
        %289 = vrot.lane.b32.xlu0 %v282, 16
        %v290 = vpop.permute.xlu0 %289
        %291 = vrot.lane.b32.xlu0 %v283, 16
        %v292 = vpop.permute.xlu0 %291
        %vm293 = vcmask 130048
        %v294 = vsel %vm293, %v288, %v290
        %v295 = vsel %vm293, %v290, %v292
        %298 = vst [vmem:[#allocation3 + $0x10] sm:$0xff] %v294
        %299 = vst [vmem:[#allocation3 + $0x18] sm:$0xff] %v295
        %v300 = vld [vmem:[#allocation2] sm:$0xff]
        %v301 = vld [vmem:[#allocation2 + $0x8] sm:$0xff]
        %v302 = vld [vmem:[#allocation2 + $0x10] sm:$0xff]
        %v303 = vsel %vm254, 1, 0
        %v304 = vsel %vm255, 1, 0
        %vm305 = vcmp.eq.s32.totalorder %v303, 1
        %vm306 = vcmp.eq.s32.totalorder %v304, 1
        %310 = vrot.lane.b32.xlu0 %v300, 15
        %v311 = vpop.permute.xlu0 %310
        %312 = vrot.lane.b32.xlu0 %v301, 15
        %v313 = vpop.permute.xlu0 %312
        %314 = vrot.lane.b32.xlu0 %v302, 15
        %v315 = vpop.permute.xlu0 %314
        %vm316 = vcmask 121856
        %v317 = vsel %vm316, %v311, %v313
        %v318 = vsel %vm316, %v313, %v315
        %v321 = vsel %vm305, %v317, 0.0
        %v322 = vsel %vm306, %v318, 0.0
        %323 = vst [vmem:[#allocation3 + $0x20] sm:$0xff] %v321
        %324 = vst [vmem:[#allocation3 + $0x28] sm:$0xff] %v322
        %v325 = vld [vmem:[#allocation2] sm:$0xff]
        %v326 = vld [vmem:[#allocation2 + $0x8] sm:$0xff]
        %v327 = vld [vmem:[#allocation2 + $0x10] sm:$0xff]
        %331 = vrot.lane.b32.xlu0 %v325, 1
        %v332 = vpop.permute.xlu0 %331
        %333 = vrot.lane.b32.xlu0 %v326, 1
        %v334 = vpop.permute.xlu0 %333
        %335 = vrot.lane.b32.xlu0 %v327, 1
        %v336 = vpop.permute.xlu0 %335
        %vm337 = vcmask 7168
        %v338 = vsel %vm337, %v332, %v334
        %v339 = vsel %vm337, %v334, %v336
        %v342 = vsel %vm261, %v338, 0.0
        %v343 = vsel %vm262, %v339, 0.0
        %344 = vst [vmem:[#allocation3 + $0x30] sm:$0xff] %v342
        %345 = vst [vmem:[#allocation3 + $0x38] sm:$0xff] %v343
        %v346 = vld [vmem:[#allocation2 + $0x8] sm:$0xff]
        %v347 = vld [vmem:[#allocation2 + $0x10] sm:$0xff]
        %348 = vst [vmem:[#allocation3 + $0x40] sm:$0xff] %v346
        %349 = vst [vmem:[#allocation3 + $0x48] sm:$0xff] %v347
        %v350 = vld [vmem:[#allocation2 + $0x8] sm:$0xff]
        %v351 = vld [vmem:[#allocation2 + $0x10] sm:$0xff]
        %v352 = vld [vmem:[#allocation2 + $0x18] sm:$0xff]
        %356 = vrot.lane.b32.xlu0 %v350, 127
        %v357 = vpop.permute.xlu0 %356
        %358 = vrot.lane.b32.xlu0 %v351, 127
        %v359 = vpop.permute.xlu0 %358
        %360 = vrot.lane.b32.xlu0 %v352, 127
        %v361 = vpop.permute.xlu0 %360
        %vm362 = vcmask 1039360
        %v363 = vsel %vm362, %v357, %v359
        %v364 = vsel %vm362, %v359, %v361
        %v367 = vsel %vm305, %v363, 0.0
        %v368 = vsel %vm306, %v364, 0.0
        %369 = vst [vmem:[#allocation3 + $0x50] sm:$0xff] %v367
        %370 = vst [vmem:[#allocation3 + $0x58] sm:$0xff] %v368
        %v371 = vld [vmem:[#allocation2 + $0x8] sm:$0xff]
        %v372 = vld [vmem:[#allocation2 + $0x10] sm:$0xff]
        %v373 = vld [vmem:[#allocation2 + $0x18] sm:$0xff]
        %377 = vrot.lane.b32.xlu0 %v371, 113
        %v378 = vpop.permute.xlu0 %377
        %379 = vrot.lane.b32.xlu0 %v372, 113
        %v380 = vpop.permute.xlu0 %379
        %381 = vrot.lane.b32.xlu0 %v373, 113
        %v382 = vpop.permute.xlu0 %381
        %vm383 = vcmask 924672
        %v384 = vsel %vm383, %v378, %v380
        %v385 = vsel %vm383, %v380, %v382
        %v388 = vsel %vm261, %v384, 0.0
        %v389 = vsel %vm262, %v385, 0.0
        %390 = vst [vmem:[#allocation3 + $0x60] sm:$0xff] %v388
        %391 = vst [vmem:[#allocation3 + $0x68] sm:$0xff] %v389
        %v392 = vld [vmem:[#allocation2 + $0x8] sm:$0xff]
        %v393 = vld [vmem:[#allocation2 + $0x10] sm:$0xff]
        %v394 = vld [vmem:[#allocation2 + $0x18] sm:$0xff]
        %398 = vrot.lane.b32.xlu0 %v392, 112
        %v399 = vpop.permute.xlu0 %398
        %400 = vrot.lane.b32.xlu0 %v393, 112
        %v401 = vpop.permute.xlu0 %400
        %402 = vrot.lane.b32.xlu0 %v394, 112
        %v403 = vpop.permute.xlu0 %402
        %vm404 = vcmask 916480
        %v405 = vsel %vm404, %v399, %v401
        %v406 = vsel %vm404, %v401, %v403
        %409 = vst [vmem:[#allocation3 + $0x70] sm:$0xff] %v405
        %410 = vst [vmem:[#allocation3 + $0x78] sm:$0xff] %v406
        %v411 = vld [vmem:[#allocation2 + $0x8] sm:$0xff]
        %v412 = vld [vmem:[#allocation2 + $0x10] sm:$0xff]
        %v413 = vld [vmem:[#allocation2 + $0x18] sm:$0xff]
        %417 = vrot.lane.b32.xlu0 %v411, 111
        %v418 = vpop.permute.xlu0 %417
        %419 = vrot.lane.b32.xlu0 %v412, 111
        %v420 = vpop.permute.xlu0 %419
        %421 = vrot.lane.b32.xlu0 %v413, 111
        %v422 = vpop.permute.xlu0 %421
        %vm423 = vcmask 908288
        %v424 = vsel %vm423, %v418, %v420
        %v425 = vsel %vm423, %v420, %v422
        %v428 = vsel %vm305, %v424, 0.0
        %v429 = vsel %vm306, %v425, 0.0
        %430 = vst [vmem:[#allocation3 + $0x80] sm:$0xff] %v428
        %431 = vst [vmem:[#allocation3 + $0x88] sm:$0xff] %v429
        %v432 = vld [vmem:[#allocation4] sm:$0xf]
        %v433 = vld [vmem:[#allocation3] sm:$0xff]
        %v434 = vld [vmem:[#allocation3 + $0x8] sm:$0xff]
        %v435 = vld [vmem:[#allocation3 + $0x10] sm:$0xff]
        %v436 = vld [vmem:[#allocation3 + $0x18] sm:$0xff]
        %v437 = vld [vmem:[#allocation3 + $0x20] sm:$0xff]
        %v438 = vld [vmem:[#allocation3 + $0x28] sm:$0xff]
        %v439 = vld [vmem:[#allocation3 + $0x30] sm:$0xff]
        %v440 = vld [vmem:[#allocation3 + $0x38] sm:$0xff]
        %v441 = vld [vmem:[#allocation3 + $0x40] sm:$0xff]
        %v442 = vld [vmem:[#allocation3 + $0x48] sm:$0xff]
        %v443 = vld [vmem:[#allocation3 + $0x50] sm:$0xff]
        %v444 = vld [vmem:[#allocation3 + $0x58] sm:$0xff]
        %v445 = vld [vmem:[#allocation3 + $0x60] sm:$0xff]
        %v446 = vld [vmem:[#allocation3 + $0x68] sm:$0xff]
        %v447 = vld [vmem:[#allocation3 + $0x70] sm:$0xff]
        %v448 = vld [vmem:[#allocation3 + $0x78] sm:$0xff]
        %v449 = vld [vmem:[#allocation3 + $0x80] sm:$0xff]
        %v450 = vld [vmem:[#allocation3 + $0x88] sm:$0xff]
        %v451 = vpack.c.bf16 %v435, %v433
        %v452 = vpack.c.bf16 %v436, %v434
        %v453 = vpack.c.bf16 %v439, %v437
        %v454 = vpack.c.bf16 %v440, %v438
        %v455 = vpack.c.bf16 %v443, %v441
        %v456 = vpack.c.bf16 %v444, %v442
        %v457 = vpack.c.bf16 %v447, %v445
        %v458 = vpack.c.bf16 %v448, %v446
        %v459 = vpack.c.bf16 %v449, %v449
        %v460 = vpack.c.bf16 %v450, %v450
        %vm461 = vcmask 588800
        %v463 = vsel %vm461, %v432, 0
        %vm465 = vcmask 1043456
        %v467 = vsel %vm465, %v459, 0
        %v470 = vsel %vm465, %v460, 0
        %472 = vmatpush.bf16.msra.mxu0 0
        %473 = vmatpush.bf16.msra.mxu0 0
        %474 = vmatpush.bf16.msra.mxu0 0
        %475 = vmatpush.bf16.msra.mxu0 %v467
        %476 = vmatpush.bf16.msra.mxu0 %v457
        %477 = vmatpush.bf16.msra.mxu0 %v455
        %478 = vmatpush.bf16.msra.mxu0 %v453
        %479 = vmatpush.bf16.msra.mxu0 %v451
        %480 = vmatmul.bf16.gmra.mxu0 %v463
        %v481 = vpop.f32.mrf.mxu0
        %v482 = vadd.f32 0.0, %v481
        %v483 = vpop.f32.mrf.mxu0
        %484 = vdwg.mxu0
        %485 = vmatpush.bf16.msra.mxu0 0
        %486 = vmatpush.bf16.msra.mxu0 0
        %487 = vmatpush.bf16.msra.mxu0 0
        %488 = vmatpush.bf16.msra.mxu0 %v470
        %489 = vmatpush.bf16.msra.mxu0 %v458
        %490 = vmatpush.bf16.msra.mxu0 %v456
        %491 = vmatpush.bf16.msra.mxu0 %v454
        %492 = vmatpush.bf16.msra.mxu0 %v452
        %493 = vmatmul.bf16.gmra.mxu0 %v463
        %v494 = vpop.f32.mrf.mxu0
        %v495 = vadd.f32 0.0, %v494
        %v496 = vpop.f32.mrf.mxu0
        %497 = vdwg.mxu0
        %v498 = vld [vmem:[%s2] sm:$0xff]
        %500 = vset.pattern.permute.xlu0 0
        %501 = vperm.xlu0 %500, %v498
        %v502 = vpop.permute.xlu0 %501
        %v504 = vmul.f32 %v482, %v502
        %v505 = vmul.f32 %v495, %v502
        %v506 = vld [vmem:[%s3] sm:$0xff]
        %508 = vset.pattern.permute.xlu0 0
        %509 = vperm.xlu0 %508, %v506
        %v510 = vpop.permute.xlu0 %509
        %v512 = vadd.f32 %v504, %v510
        %v513 = vadd.f32 %v505, %v510
        %v514 = vmax.f32 %v512, 0.0
        %v515 = vmax.f32 %v513, 0.0
        %516 = vst [vmem:[%s205] sm:$0xff] %v514
        %517 = vst [vmem:[%s205 + $0x8] sm:$0xff] %v515
        %s518 = sand.u32 %s116, 1
        %s519 = scalar_lea.sflag [#allocation6], %s518
        %s520 = sand.u32 %s116, 1
        %s521 = smul.addr %s520, 16
        %s522 = scalar_lea.vmem [#allocation7], %s521
        // Predicated region
        $region41: #{tpu_custom_call.1} parent=35 // pred_check
          %p523 = pneg %p126
        $region42: #{tpu_custom_call.1} parent=35 // pred_check_branch
          %525 = sbr.rel (%p523) target = $region44
        $region43: #{tpu_custom_call.1} parent=35 // pred_region
          %527 = vsyncadd %s519, 0
          %s528 = smul.addr %s19, 2
          %s529 = smul.addr %s528, 8
          %s530 = scalar_lea.hbm %s4, %s529
          %s532 = sshll.u32 %s522, 4
          %s533 = int_to_ptr.vmem [resolvable:$true] %s532
          %s534 = sshll.u32 %s530, 4
          %s535 = int_to_ptr.hbm [resolvable:$true] %s534
          %537 = dma.vmem_to_hbm [thread:$0]  %s533, 256, %s535, %s519
        $region44: #{tpu_custom_call.1} parent=35 // pred_fallthru
          _
      $region36: #{tpu_custom_call.1} parent=5 // pred_fallthru
        _
      %p538 = scmp.le.s32.totalorder 2, %s14
      // Predicated region
      $region45: #{tpu_custom_call.1} parent=5 // pred_check
        %p539 = pneg %p538
      $region46: #{tpu_custom_call.1} parent=5 // pred_check_branch
        %541 = sbr.rel (%p539) target = $region48
      $region47: #{tpu_custom_call.1} parent=5 // pred_region
        %s542 = ssub.s32 %s14, 2
        // Predicated region
        $region49: #{tpu_custom_call.1} parent=47 // pred_check
          %p543 = pneg %p132
        $region50: #{tpu_custom_call.1} parent=47 // pred_check_branch
          %545 = sbr.rel (%p543) target = $region52
        $region51: #{tpu_custom_call.1} parent=47 // pred_region
          %s546 = sand.u32 %s117, 1
          %s547 = scalar_lea.sflag [#allocation6], %s546
          %s548 = sand.u32 %s117, 1
          %s549 = smul.addr %s548, 16
          %s550 = scalar_lea.vmem [#allocation7], %s549
          %552 = dma.done %s547, 256
        $region52: #{tpu_custom_call.1} parent=47 // pred_fallthru
          _
      $region48: #{tpu_custom_call.1} parent=5 // pred_fallthru
        _
    $region6: #{tpu_custom_call.1} parent=1 // loop_footer
      %s18 = sadd.s32 1, %s14
    $region7: #{tpu_custom_call.1} parent=1 // loop_footer_branch
      %13 = sbr.rel target = $region3
    $region8: #{tpu_custom_call.1} parent=1 // loop_exit
      _
    %553 = vsyncpa [#allocation5], 1
    %s554 = scalar_lea.sflag [#allocation5], 1
    %555 = vsyncpa %s554, 1
    %556 = vsyncpa [#allocation6], 1
    %s557 = scalar_lea.sflag [#allocation6], 1
    %558 = vsyncpa %s557, 1

</llo_original>
